<compile_context>
chip_gen: v7x
topology: tpu7x:2x2x1
jax: 0.10.0
libtpu: 0.0.40
codegen_flags: <defaults>
</compile_context>

<pallas_src>
import functools

import jax
import jax.numpy as jnp
from jax.experimental import pallas as pl
from jax.experimental.pallas import tpu as pltpu

_LANE = 128                          # feature dims padded to multiples of this
_SUBLANE = 8                         # batch tile must be a multiple of this
_MAX_TB = 1024                       # batch-tile cap (amortizes per-step overhead)
_VMEM_LIMIT_BYTES = 32 * 1024 * 1024  # explicit scoped limit: safe on v5e/v6e/v7x
_VMEM_SLACK_BYTES = 2 * 1024 * 1024   # headroom for Mosaic internal scratch


def _round_up(x, m):
    return ((x + m - 1) // m) * m


def _single_buffer_supported():
    """Probe once whether pipeline_mode=pl.Buffered(1) is available."""
    if not hasattr(pl, "Buffered"):
        return False
    try:
        pl.BlockSpec((_SUBLANE, _LANE), lambda i: (0, 0),
                     pipeline_mode=pl.Buffered(1))
        return True
    except TypeError:
        return False


_SINGLE_BUFFER_WEIGHTS = _single_buffer_supported()


def _resident_spec(shape):
    """BlockSpec for a grid-invariant operand (same block every step).

    Single-buffered when supported: double-buffering a constant-index operand
    just doubles its VMEM footprint for nothing.
    """
    idx = lambda i: (0,) * len(shape)
    if _SINGLE_BUFFER_WEIGHTS:
        return pl.BlockSpec(shape, idx, pipeline_mode=pl.Buffered(1))
    return pl.BlockSpec(shape, idx)


def _make_fused_mlp_kernel(num_layers):
    """Fused (Linear -> ReLU) x num_layers. Refs: x, (w, b)*L, out."""

    def kernel(*refs):
        x_ref = refs[0]
        o_ref = refs[-1]
        h = x_ref[...]                       # x streamed in its original dtype
        for li in range(num_layers):
            w_ref = refs[1 + 2 * li]
            b_ref = refs[2 + 2 * li]
            # Cast to MXU dtype in-kernel (no host pre-pass), f32 accumulate.
            y = jnp.dot(h.astype(w_ref.dtype), w_ref[...],
                        preferred_element_type=jnp.float32)
            y = y + b_ref[...]               # bias [1, d_out_pad] broadcasts (f32)
            h = jnp.maximum(y, 0.0)          # ReLU in f32 on the VPU
            # Dropout(p=0.0) is the identity -> omitted.
        o_ref[...] = h.astype(o_ref.dtype)

    return kernel


def make_mlp_params(key, input_dim, output_dim, num_layers=3):
    """Deterministic parameter init matching nn.init.uniform_ (U(0,1))."""
    step_size = (input_dim - output_dim) // num_layers
    hidden_dims = [output_dim + i * step_size for i in reversed(range(num_layers))]
    params = []
    layer_indim = input_dim
    for hidden_dim in hidden_dims:
        key, kw, kb = jax.random.split(key, 3)
        # stored as [in, out] (transpose of torch's [out, in]) for X @ W
        w = jax.random.uniform(kw, (layer_indim, hidden_dim), dtype=jnp.float32)
        b = jax.random.uniform(kb, (1, hidden_dim), dtype=jnp.float32)
        params.append((w, b))
        layer_indim = hidden_dim
    return params


@functools.partial(jax.jit,
                   static_argnames=("mxu_dtype", "out_dtype", "return_padded"))
def mlp_forward(x, params, mxu_dtype=jnp.bfloat16, out_dtype=None,
                return_padded=False):
    """Forward pass: (Linear -> Dropout(p=0) -> ReLU) per layer, fused into a
    single Pallas call.

    x: [B, Din].  params: list of (w [Din_l, Dout_l], b [1, Dout_l]) in f32.
    mxu_dtype: dtype fed to the MXU (default bf16; accumulation/bias/ReLU stay
               f32).  Pass jnp.float32 for an exact path.
    out_dtype: output dtype (default x.dtype).
    return_padded: if True, return the lane-dense [B, round_up(Dout,128)]
               array directly (skips the XLA slice pass).
    """
    B, Din = x.shape
    num_layers = len(params)
    dims = [Din] + [w.shape[1] for w, _ in params]
    # Only hidden/output feature dims are padded; the x stream stays at Din.
    pdims = [Din] + [_round_up(d, _LANE) for d in dims[1:]]

    odt = jnp.dtype(out_dtype) if out_dtype is not None else x.dtype
    mxu_dt = jnp.dtype(mxu_dtype)

    # Zero-pad weights/biases to lane-dense shapes (exact; ReLU(0)=0 keeps the
    # padded activation lanes at 0 through every layer).
    padded_params = []
    for li, (w, b) in enumerate(params):
        wp = jnp.pad(w, ((0, pdims[li] - w.shape[0]),
                         (0, pdims[li + 1] - w.shape[1]))).astype(mxu_dt)
        bp = jnp.pad(b, ((0, 0), (0, pdims[li + 1] - b.shape[1])))  # keep f32
        padded_params.append((wp, bp))

    # ---- VMEM budgeting -> batch tile TB -------------------------------------
    x_isz = x.dtype.itemsize
    o_isz = odt.itemsize
    w_isz = mxu_dt.itemsize
    wbuf = 1 if _SINGLE_BUFFER_WEIGHTS else 2
    resident_bytes = wbuf * sum(int(wp.size) * w_isz + int(bp.size) * 4
                                for wp, bp in padded_params)
    max_pd = max(pdims[1:])
    per_row_bytes = (2 * Din * x_isz          # double-buffered input tile
                     + 2 * pdims[-1] * o_isz  # double-buffered output tile
                     + 2 * max_pd * 4         # f32 activations / accumulator
                     + max_pd * w_isz)        # MXU-dtype cast copy
    budget = _VMEM_LIMIT_BYTES - _VMEM_SLACK_BYTES - resident_bytes
    if budget < _SUBLANE * per_row_bytes:
        # TODO(synk): add an N/K-tiled fallback (grid axis marked "arbitrary"
        # with an f32 VMEM accumulator) instead of whole-weight VMEM residency
        # for very wide layers; the breakpoint is half as large on v7x (64 MiB).
        raise ValueError(
            "MLP weights too large for the fused VMEM-resident kernel "
            f"(resident {resident_bytes} B vs budget {_VMEM_LIMIT_BYTES} B).")
    tb_cap = min(_MAX_TB,
                 max(_SUBLANE, (budget // per_row_bytes) // _SUBLANE * _SUBLANE))
    # Balance tiles so the padded-batch waste stays < one sublane group per tile.
    n_tiles = pl.cdiv(B, tb_cap)
    TB = min(tb_cap, _round_up(pl.cdiv(B, n_tiles), _SUBLANE))
    grid = (pl.cdiv(B, TB),)  # partial last tile handled by Pallas masking

    # ---- BlockSpecs ----------------------------------------------------------
    in_specs = [pl.BlockSpec((TB, Din), lambda i: (i, 0))]  # x unpadded, uncast
    flat_args = [x]
    for wp, bp in padded_params:
        in_specs.append(_resident_spec(wp.shape))
        in_specs.append(_resident_spec(bp.shape))
        flat_args += [wp, bp]

    flops = 2 * grid[0] * TB * sum(int(wp.shape[0]) * int(wp.shape[1])
                                   for wp, _ in padded_params)
    bytes_accessed = (B * Din * x_isz
                      + sum(int(wp.size) * w_isz + int(bp.size) * 4
                            for wp, bp in padded_params)
                      + B * pdims[-1] * o_isz)

    # TODO(synk): on v7x verify via xprof that both TensorCores run the batch
    # axis; if one TC is idle, switch to pltpu.CORE_PARALLEL / pl.core_map.
    out_padded = pl.pallas_call(
        _make_fused_mlp_kernel(num_layers),
        out_shape=jax.ShapeDtypeStruct((B, pdims[-1]), odt),
        grid=grid,
        in_specs=in_specs,
        out_specs=pl.BlockSpec((TB, pdims[-1]), lambda i: (i, 0)),
        compiler_params=pltpu.CompilerParams(
            dimension_semantics=("parallel",),
            vmem_limit_bytes=_VMEM_LIMIT_BYTES,
        ),
        cost_estimate=pl.CostEstimate(flops=flops, transcendentals=0,
                                      bytes_accessed=bytes_accessed),
    )(*flat_args)

    if return_padded:
        return out_padded                 # lane-dense layout for fused consumers
    return out_padded[:, :dims[-1]]


if __name__ == "__main__":
    key = jax.random.PRNGKey(0)
    input_dim, output_dim, num_layers = 32, 8, 3
    batch = 8

    kx, kp = jax.random.split(key)
    x = jax.random.uniform(kx, (batch, input_dim), dtype=jnp.float32)
    params = make_mlp_params(kp, input_dim, output_dim, num_layers)

    # Reference in plain JAX (same math as the PyTorch module, dropout p=0).
    ref = x
    for w, b in params:
        ref = jnp.maximum(ref @ w + b, 0.0)

    # Exact f32 MXU path: tight tolerance check.
    out_f32 = jax.block_until_ready(mlp_forward(x, params, mxu_dtype=jnp.float32))
    assert out_f32.shape == (batch, output_dim)
    assert jnp.allclose(out_f32, ref, atol=1e-5, rtol=1e-5)

    # Default path: bf16 MXU inputs, f32 accumulate (looser tolerance expected).
    out_default = jax.block_until_ready(mlp_forward(x, params))
    assert out_default.shape == (batch, output_dim)
    assert jnp.allclose(out_default, ref, atol=5e-1, rtol=5e-2)

    print("KERNEL_OK")
</pallas_src>

<mosaic_0001>
module attributes {stable_mosaic.version = 11 : i64} {
  func.func @kernel(%arg0: i32, %arg1: memref<8x32xf32, #tpu.memory_space<vmem>>, %arg2: memref<32x128xf32, #tpu.memory_space<vmem>>, %arg3: memref<1x128xf32, #tpu.memory_space<vmem>>, %arg4: memref<128x128xf32, #tpu.memory_space<vmem>>, %arg5: memref<1x128xf32, #tpu.memory_space<vmem>>, %arg6: memref<128x128xf32, #tpu.memory_space<vmem>>, %arg7: memref<1x128xf32, #tpu.memory_space<vmem>>, %arg8: memref<8x128xf32, #tpu.memory_space<vmem>>) attributes {dimension_semantics = [#tpu.dimension_semantics<parallel>], iteration_bounds = array<i64: 1>, scalar_prefetch = 0 : i64, scratch_operands = 0 : i64, tpu.core_type = #tpu.core_type<tc>, window_params = [{transform_indices = @transform_0, window_bounds = array<i64: 8, 32>}, {pipeline_mode = #tpu.pipeline_mode<synchronous>, transform_indices = @transform_1, window_bounds = array<i64: 32, 128>}, {pipeline_mode = #tpu.pipeline_mode<synchronous>, transform_indices = @transform_2, window_bounds = array<i64: 1, 128>}, {pipeline_mode = #tpu.pipeline_mode<synchronous>, transform_indices = @transform_3, window_bounds = array<i64: 128, 128>}, {pipeline_mode = #tpu.pipeline_mode<synchronous>, transform_indices = @transform_4, window_bounds = array<i64: 1, 128>}, {pipeline_mode = #tpu.pipeline_mode<synchronous>, transform_indices = @transform_5, window_bounds = array<i64: 128, 128>}, {pipeline_mode = #tpu.pipeline_mode<synchronous>, transform_indices = @transform_6, window_bounds = array<i64: 1, 128>}, {transform_indices = @transform_7, window_bounds = array<i64: 8, 128>}]} {
    %c0 = arith.constant 0 : index
    %c0_0 = arith.constant 0 : index
    %0 = vector.load %arg1[%c0, %c0_0] : memref<8x32xf32, #tpu.memory_space<vmem>>, vector<8x32xf32>
    %c0_1 = arith.constant 0 : index
    %c0_2 = arith.constant 0 : index
    %1 = vector.load %arg2[%c0_1, %c0_2] : memref<32x128xf32, #tpu.memory_space<vmem>>, vector<32x128xf32>
    %cst = arith.constant dense<0.000000e+00> : vector<8x128xf32>
    %2 = tpu.matmul %0, %1, %cst {dimension_numbers = #tpu.dot_dimension_numbers<[1], [0], [0], [1], [0, 0, 1, 1], [], []>} : vector<8x32xf32>, vector<32x128xf32>, vector<8x128xf32> -> vector<8x128xf32>
    %c0_3 = arith.constant 0 : index
    %c0_4 = arith.constant 0 : index
    %3 = vector.load %arg3[%c0_3, %c0_4] : memref<1x128xf32, #tpu.memory_space<vmem>>, vector<1x128xf32>
    %4 = vector.broadcast %3 : vector<1x128xf32> to vector<8x128xf32>
    %5 = arith.addf %2, %4 : vector<8x128xf32>
    %cst_5 = arith.constant 0.000000e+00 : f32
    %6 = vector.broadcast %cst_5 : f32 to vector<8x128xf32>
    %7 = arith.maximumf %5, %6 : vector<8x128xf32>
    %c0_6 = arith.constant 0 : index
    %c0_7 = arith.constant 0 : index
    %8 = vector.load %arg4[%c0_6, %c0_7] : memref<128x128xf32, #tpu.memory_space<vmem>>, vector<128x128xf32>
    %cst_8 = arith.constant dense<0.000000e+00> : vector<8x128xf32>
    %9 = tpu.matmul %7, %8, %cst_8 {dimension_numbers = #tpu.dot_dimension_numbers<[1], [0], [0], [1], [0, 0, 1, 1], [], []>} : vector<8x128xf32>, vector<128x128xf32>, vector<8x128xf32> -> vector<8x128xf32>
    %c0_9 = arith.constant 0 : index
    %c0_10 = arith.constant 0 : index
    %10 = vector.load %arg5[%c0_9, %c0_10] : memref<1x128xf32, #tpu.memory_space<vmem>>, vector<1x128xf32>
    %11 = vector.broadcast %10 : vector<1x128xf32> to vector<8x128xf32>
    %12 = arith.addf %9, %11 : vector<8x128xf32>
    %cst_11 = arith.constant 0.000000e+00 : f32
    %13 = vector.broadcast %cst_11 : f32 to vector<8x128xf32>
    %14 = arith.maximumf %12, %13 : vector<8x128xf32>
    %c0_12 = arith.constant 0 : index
    %c0_13 = arith.constant 0 : index
    %15 = vector.load %arg6[%c0_12, %c0_13] : memref<128x128xf32, #tpu.memory_space<vmem>>, vector<128x128xf32>
    %cst_14 = arith.constant dense<0.000000e+00> : vector<8x128xf32>
    %16 = tpu.matmul %14, %15, %cst_14 {dimension_numbers = #tpu.dot_dimension_numbers<[1], [0], [0], [1], [0, 0, 1, 1], [], []>} : vector<8x128xf32>, vector<128x128xf32>, vector<8x128xf32> -> vector<8x128xf32>
    %c0_15 = arith.constant 0 : index
    %c0_16 = arith.constant 0 : index
    %17 = vector.load %arg7[%c0_15, %c0_16] : memref<1x128xf32, #tpu.memory_space<vmem>>, vector<1x128xf32>
    %18 = vector.broadcast %17 : vector<1x128xf32> to vector<8x128xf32>
    %19 = arith.addf %16, %18 : vector<8x128xf32>
    %cst_17 = arith.constant 0.000000e+00 : f32
    %20 = vector.broadcast %cst_17 : f32 to vector<8x128xf32>
    %21 = arith.maximumf %19, %20 : vector<8x128xf32>
    %c0_18 = arith.constant 0 : index
    %c0_19 = arith.constant 0 : index
    %22 = vector.load %arg8[%c0_18, %c0_19] : memref<8x128xf32, #tpu.memory_space<vmem>>, vector<8x128xf32>
    tpu.vector_store %arg8[%c0_18, %c0_19], %21 {strides = array<i32>} : memref<8x128xf32, #tpu.memory_space<vmem>>, vector<8x128xf32>,
    return
  }
  func.func @transform_0(%arg0: i32) -> (i32, i32) {
    %c0_i32 = arith.constant 0 : i32
    %c0_i32_0 = arith.constant 0 : i32
    return %arg0, %c0_i32 : i32, i32
  }
  func.func @transform_1(%arg0: i32) -> (i32, i32) {
    %c0_i32 = arith.constant 0 : i32
    %c0_i32_0 = arith.constant 0 : i32
    %c0_i32_1 = arith.constant 0 : i32
    return %c0_i32, %c0_i32_0 : i32, i32
  }
  func.func @transform_2(%arg0: i32) -> (i32, i32) {
    %c0_i32 = arith.constant 0 : i32
    %c0_i32_0 = arith.constant 0 : i32
    %c0_i32_1 = arith.constant 0 : i32
    return %c0_i32, %c0_i32_0 : i32, i32
  }
  func.func @transform_3(%arg0: i32) -> (i32, i32) {
    %c0_i32 = arith.constant 0 : i32
    %c0_i32_0 = arith.constant 0 : i32
    %c0_i32_1 = arith.constant 0 : i32
    return %c0_i32, %c0_i32_0 : i32, i32
  }
  func.func @transform_4(%arg0: i32) -> (i32, i32) {
    %c0_i32 = arith.constant 0 : i32
    %c0_i32_0 = arith.constant 0 : i32
    %c0_i32_1 = arith.constant 0 : i32
    return %c0_i32, %c0_i32_0 : i32, i32
  }
  func.func @transform_5(%arg0: i32) -> (i32, i32) {
    %c0_i32 = arith.constant 0 : i32
    %c0_i32_0 = arith.constant 0 : i32
    %c0_i32_1 = arith.constant 0 : i32
    return %c0_i32, %c0_i32_0 : i32, i32
  }
  func.func @transform_6(%arg0: i32) -> (i32, i32) {
    %c0_i32 = arith.constant 0 : i32
    %c0_i32_0 = arith.constant 0 : i32
    %c0_i32_1 = arith.constant 0 : i32
    return %c0_i32, %c0_i32_0 : i32, i32
  }
  func.func @transform_7(%arg0: i32) -> (i32, i32) {
    %c0_i32 = arith.constant 0 : i32
    %c0_i32_0 = arith.constant 0 : i32
    return %arg0, %c0_i32 : i32, i32
  }
}

</mosaic_0001>

<llo_original>
// kernel: mlp_forward.1
$region0: #{mlp_forward.1}
  #allocation0 [shape = 'u32[]', space=smem, size = 0x4, offset = 0x4, fixed_abs, tag = 'smem constant byte address 0x4 - core index']
  #allocation1 [shape = 'u32[144,128]{1,0:T(1,128)}', space=vmem, size = 0x12000, scoped, tag = 'internal scratch']
  %s0 = inlined_call_operand.vmem [shape: f32[8,32], index: 0, kind: input, shape index: {}]
  %s1 = inlined_call_operand.vmem [shape: f32[32,128], index: 1, kind: input, shape index: {}]
  %s2 = inlined_call_operand.vmem [shape: f32[1,128], index: 2, kind: input, shape index: {}]
  %s3 = inlined_call_operand.vmem [shape: f32[128,128], index: 3, kind: input, shape index: {}]
  %s4 = inlined_call_operand.vmem [shape: f32[1,128], index: 4, kind: input, shape index: {}]
  %s5 = inlined_call_operand.vmem [shape: f32[128,128], index: 5, kind: input, shape index: {}]
  %s6 = inlined_call_operand.vmem [shape: f32[1,128], index: 6, kind: input, shape index: {}]
  %s7 = inlined_call_operand.hbm [shape: f32[8,128], index: 7, kind: output, shape index: {}]
  %s8 = sld [smem:[#allocation0]]
  $region38: #{mlp_forward.1} parent=0
    _
  %s10 = ssub.s32 1, %s8
  %s11 = scalar_select 0, %s10, %s8
  $region1: #{mlp_forward.1} parent=0
    #allocation2 [shape = 'u8[4096]{0}', space=vmem, size = 0x1000, scoped, tag = 'output window, operand 0, single buffered']
    #allocation3 [shape = 's32[1]{0}', space=sflag, size = 0x4, scoped, tag = 'scoped memory for mlp_forward.1']
    %12 = vsyncpa [#allocation3], 0
    // Predicated region
    $region2: #{mlp_forward.1} parent=1 // pred_check
      _
    $region3: #{mlp_forward.1} parent=1 // pred_check_branch
      %14 = sbr.rel (0) target = $region5
    $region4: #{mlp_forward.1} parent=1 // pred_region
      _
    $region5: #{mlp_forward.1} parent=1 // pred_fallthru
      _
    // Predicated region
    $region6: #{mlp_forward.1} parent=1 // pred_check
      _
    $region7: #{mlp_forward.1} parent=1 // pred_check_branch
      %16 = sbr.rel (0) target = $region9
    $region8: #{mlp_forward.1} parent=1 // pred_region
      _
    $region9: #{mlp_forward.1} parent=1 // pred_fallthru
      _
    // Predicated region
    $region10: #{mlp_forward.1} parent=1 // pred_check
      _
    $region11: #{mlp_forward.1} parent=1 // pred_check_branch
      %18 = sbr.rel (0) target = $region13
    $region12: #{mlp_forward.1} parent=1 // pred_region
      _
    $region13: #{mlp_forward.1} parent=1 // pred_fallthru
      _
    // Predicated region
    $region14: #{mlp_forward.1} parent=1 // pred_check
      _
    $region15: #{mlp_forward.1} parent=1 // pred_check_branch
      %20 = sbr.rel (0) target = $region17
    $region16: #{mlp_forward.1} parent=1 // pred_region
      _
    $region17: #{mlp_forward.1} parent=1 // pred_fallthru
      _
    // Predicated region
    $region18: #{mlp_forward.1} parent=1 // pred_check
      _
    $region19: #{mlp_forward.1} parent=1 // pred_check_branch
      %22 = sbr.rel (0) target = $region21
    $region20: #{mlp_forward.1} parent=1 // pred_region
      _
    $region21: #{mlp_forward.1} parent=1 // pred_fallthru
      _
    // Predicated region
    $region22: #{mlp_forward.1} parent=1 // pred_check
      _
    $region23: #{mlp_forward.1} parent=1 // pred_check_branch
      %24 = sbr.rel (0) target = $region25
    $region24: #{mlp_forward.1} parent=1 // pred_region
      _
    $region25: #{mlp_forward.1} parent=1 // pred_fallthru
      _
    // Predicated region
    $region26: #{mlp_forward.1} parent=1 // pred_check
      _
    $region27: #{mlp_forward.1} parent=1 // pred_check_branch
      %26 = sbr.rel (0) target = $region29
    $region28: #{mlp_forward.1} parent=1 // pred_region
      _
    $region29: #{mlp_forward.1} parent=1 // pred_fallthru
      _
    %v27 = vld [vmem:[%s0] sm:$0xff]
    %v28 = vld [vmem:[%s1] sm:$0xff]
    %v29 = vld [vmem:[%s1 + $0x8] sm:$0xff]
    %v30 = vld [vmem:[%s1 + $0x10] sm:$0xff]
    %v31 = vld [vmem:[%s1 + $0x18] sm:$0xff]
    %v32 = vld [vmem:[%s2] sm:$0x1]
    %v34 = vlaneseq
    %v35 = vshrl.u32 %v34, 7
    %v36 = vsub.s32 0, %v35
    %v37 = vrot.slane %v32, %v36
    %vm39 = vcmask 261120
    %v41 = vsel %vm39, %v27, 0
    %43 = vmatprep.subr.mxu0 0.0
    %44 = vmatpush1.msra.mxu0 %v28
    %45 = vmatprep.subr.mxu0 0.0
    %46 = vmatpush1.msra.mxu0 %v29
    %47 = vmatprep.subr.mxu0 0.0
    %48 = vmatpush1.msra.mxu0 %v30
    %49 = vmatprep.subr.mxu0 0.0
    %50 = vmatpush1.msra.mxu0 %v31
    %51 = vmatprep.subr.mxu0 0.0
    %52 = vmatpush1.msra.mxu0 0.0
    %53 = vmatprep.subr.mxu0 0.0
    %54 = vmatpush1.msra.mxu0 0.0
    %55 = vmatprep.subr.mxu0 0.0
    %56 = vmatpush1.msra.mxu0 0.0
    %57 = vmatprep.subr.mxu0 0.0
    %58 = vmatpush1.msra.mxu0 0.0
    %59 = vmatprep.subr.mxu0 0.0
    %60 = vmatpush1.msra.mxu0 0.0
    %61 = vmatprep.subr.mxu0 0.0
    %62 = vmatpush1.msra.mxu0 0.0
    %63 = vmatprep.subr.mxu0 0.0
    %64 = vmatpush1.msra.mxu0 0.0
    %65 = vmatprep.subr.mxu0 0.0
    %66 = vmatpush1.msra.mxu0 0.0
    %67 = vmatprep.subr.mxu0 0.0
    %68 = vmatpush1.msra.mxu0 0.0
    %69 = vmatprep.subr.mxu0 0.0
    %70 = vmatpush1.msra.mxu0 0.0
    %71 = vmatprep.subr.mxu0 0.0
    %72 = vmatpush1.msra.mxu0 0.0
    %73 = vmatprep.subr.mxu0 0.0
    %74 = vmatpush1.msra.mxu0 0.0
    %75 = vmatprep.subr.mxu0 0.0
    %76 = vmatpush1.msra.mxu0 0.0
    %77 = vmatprep.subr.mxu0 0.0
    %78 = vmatpush1.msra.mxu0 0.0
    %79 = vmatprep.subr.mxu0 0.0
    %80 = vmatpush1.msra.mxu0 0.0
    %81 = vmatprep.subr.mxu0 0.0
    %82 = vmatpush1.msra.mxu0 0.0
    %83 = vmatprep.subr.mxu0 0.0
    %84 = vmatpush1.msra.mxu0 0.0
    %85 = vmatprep.subr.mxu0 0.0
    %86 = vmatpush1.msra.mxu0 0.0
    %87 = vmatprep.subr.mxu0 0.0
    %88 = vmatpush1.msra.mxu0 0.0
    %89 = vmatprep.subr.mxu0 0.0
    %90 = vmatpush1.msra.mxu0 0.0
    %91 = vmatprep.subr.mxu0 0.0
    %92 = vmatpush1.msra.mxu0 0.0
    %93 = vmatprep.subr.mxu0 0.0
    %94 = vmatpush1.msra.mxu0 0.0
    %95 = vmatprep.subr.mxu0 0.0
    %96 = vmatpush1.msra.mxu0 0.0
    %97 = vmatprep.subr.mxu0 0.0
    %98 = vmatpush1.msra.mxu0 0.0
    %99 = vmatprep.subr.mxu0 0.0
    %100 = vmatpush1.msra.mxu0 0.0
    %101 = vmatprep.subr.mxu0 0.0
    %102 = vmatpush1.msra.mxu0 0.0
    %103 = vmatprep.subr.mxu0 0.0
    %104 = vmatpush1.msra.mxu0 0.0
    %105 = vmatprep.subr.mxu0 0.0
    %106 = vmatpush1.msra.mxu0 0.0
    %107 = vmatprep.mubr.f32.mxu0 0.0
    %108 = vmatmul.mubr.f32.gmra.mrb[0].mxu0 %v41
    %v109 = vpop.f32.mrb[0].mxu0
    %v110 = vadd.f32 %v37, %v109
    %v111 = vpop.f32.mrb[0].mxu0
    %112 = vdwg.mxu0
    %v113 = vmax.f32 %v110, 0.0
    %v114 = vld [vmem:[%s3] sm:$0xff]
    %v115 = vld [vmem:[%s3 + $0x8] sm:$0xff]
    %v116 = vld [vmem:[%s3 + $0x10] sm:$0xff]
    %v117 = vld [vmem:[%s3 + $0x18] sm:$0xff]
    %v118 = vld [vmem:[%s3 + $0x20] sm:$0xff]
    %v119 = vld [vmem:[%s3 + $0x28] sm:$0xff]
    %v120 = vld [vmem:[%s3 + $0x30] sm:$0xff]
    %v121 = vld [vmem:[%s3 + $0x38] sm:$0xff]
    %v122 = vld [vmem:[%s3 + $0x40] sm:$0xff]
    %v123 = vld [vmem:[%s3 + $0x48] sm:$0xff]
    %v124 = vld [vmem:[%s3 + $0x50] sm:$0xff]
    %v125 = vld [vmem:[%s3 + $0x58] sm:$0xff]
    %v126 = vld [vmem:[%s3 + $0x60] sm:$0xff]
    %v127 = vld [vmem:[%s3 + $0x68] sm:$0xff]
    %v128 = vld [vmem:[%s3 + $0x70] sm:$0xff]
    %v129 = vld [vmem:[%s3 + $0x78] sm:$0xff]
    %v130 = vld [vmem:[%s4] sm:$0x1]
    %v132 = vlaneseq
    %v133 = vshrl.u32 %v132, 7
    %v134 = vsub.s32 0, %v133
    %v135 = vrot.slane %v130, %v134
    %137 = vmatprep.subr.mxu0 0.0
    %138 = vmatpush1.msra.mxu0 %v114
    %139 = vmatprep.subr.mxu0 0.0
    %140 = vmatpush1.msra.mxu0 %v115
    %141 = vmatprep.subr.mxu0 0.0
    %142 = vmatpush1.msra.mxu0 %v116
    %143 = vmatprep.subr.mxu0 0.0
    %144 = vmatpush1.msra.mxu0 %v117
    %145 = vmatprep.subr.mxu0 0.0
    %146 = vmatpush1.msra.mxu0 %v118
    %147 = vmatprep.subr.mxu0 0.0
    %148 = vmatpush1.msra.mxu0 %v119
    %149 = vmatprep.subr.mxu0 0.0
    %150 = vmatpush1.msra.mxu0 %v120
    %151 = vmatprep.subr.mxu0 0.0
    %152 = vmatpush1.msra.mxu0 %v121
    %153 = vmatprep.subr.mxu0 0.0
    %154 = vmatpush1.msra.mxu0 %v122
    %155 = vmatprep.subr.mxu0 0.0
    %156 = vmatpush1.msra.mxu0 %v123
    %157 = vmatprep.subr.mxu0 0.0
    %158 = vmatpush1.msra.mxu0 %v124
    %159 = vmatprep.subr.mxu0 0.0
    %160 = vmatpush1.msra.mxu0 %v125
    %161 = vmatprep.subr.mxu0 0.0
    %162 = vmatpush1.msra.mxu0 %v126
    %163 = vmatprep.subr.mxu0 0.0
    %164 = vmatpush1.msra.mxu0 %v127
    %165 = vmatprep.subr.mxu0 0.0
    %166 = vmatpush1.msra.mxu0 %v128
    %167 = vmatprep.subr.mxu0 0.0
    %168 = vmatpush1.msra.mxu0 %v129
    %169 = vmatprep.subr.mxu0 0.0
    %170 = vmatpush1.msra.mxu0 0.0
    %171 = vmatprep.subr.mxu0 0.0
    %172 = vmatpush1.msra.mxu0 0.0
    %173 = vmatprep.subr.mxu0 0.0
    %174 = vmatpush1.msra.mxu0 0.0
    %175 = vmatprep.subr.mxu0 0.0
    %176 = vmatpush1.msra.mxu0 0.0
    %177 = vmatprep.subr.mxu0 0.0
    %178 = vmatpush1.msra.mxu0 0.0
    %179 = vmatprep.subr.mxu0 0.0
    %180 = vmatpush1.msra.mxu0 0.0
    %181 = vmatprep.subr.mxu0 0.0
    %182 = vmatpush1.msra.mxu0 0.0
    %183 = vmatprep.subr.mxu0 0.0
    %184 = vmatpush1.msra.mxu0 0.0
    %185 = vmatprep.subr.mxu0 0.0
    %186 = vmatpush1.msra.mxu0 0.0
    %187 = vmatprep.subr.mxu0 0.0
    %188 = vmatpush1.msra.mxu0 0.0
    %189 = vmatprep.subr.mxu0 0.0
    %190 = vmatpush1.msra.mxu0 0.0
    %191 = vmatprep.subr.mxu0 0.0
    %192 = vmatpush1.msra.mxu0 0.0
    %193 = vmatprep.subr.mxu0 0.0
    %194 = vmatpush1.msra.mxu0 0.0
    %195 = vmatprep.subr.mxu0 0.0
    %196 = vmatpush1.msra.mxu0 0.0
    %197 = vmatprep.subr.mxu0 0.0
    %198 = vmatpush1.msra.mxu0 0.0
    %199 = vmatprep.subr.mxu0 0.0
    %200 = vmatpush1.msra.mxu0 0.0
    %201 = vmatprep.mubr.f32.mxu0 0.0
    %202 = vmatmul.mubr.f32.gmra.mrb[0].mxu0 %v113
    %v203 = vpop.f32.mrb[0].mxu0
    %v204 = vadd.f32 %v135, %v203
    %v205 = vpop.f32.mrb[0].mxu0
    %206 = vdwg.mxu0
    %v207 = vmax.f32 %v204, 0.0
    %v208 = vld [vmem:[%s5] sm:$0xff]
    %v209 = vld [vmem:[%s5 + $0x8] sm:$0xff]
    %v210 = vld [vmem:[%s5 + $0x10] sm:$0xff]
    %v211 = vld [vmem:[%s5 + $0x18] sm:$0xff]
    %v212 = vld [vmem:[%s5 + $0x20] sm:$0xff]
    %v213 = vld [vmem:[%s5 + $0x28] sm:$0xff]
    %v214 = vld [vmem:[%s5 + $0x30] sm:$0xff]
    %v215 = vld [vmem:[%s5 + $0x38] sm:$0xff]
    %v216 = vld [vmem:[%s5 + $0x40] sm:$0xff]
    %v217 = vld [vmem:[%s5 + $0x48] sm:$0xff]
    %v218 = vld [vmem:[%s5 + $0x50] sm:$0xff]
    %v219 = vld [vmem:[%s5 + $0x58] sm:$0xff]
    %v220 = vld [vmem:[%s5 + $0x60] sm:$0xff]
    %v221 = vld [vmem:[%s5 + $0x68] sm:$0xff]
    %v222 = vld [vmem:[%s5 + $0x70] sm:$0xff]
    %v223 = vld [vmem:[%s5 + $0x78] sm:$0xff]
    %v224 = vld [vmem:[%s6] sm:$0x1]
    %v226 = vlaneseq
    %v227 = vshrl.u32 %v226, 7
    %v228 = vsub.s32 0, %v227
    %v229 = vrot.slane %v224, %v228
    %231 = vmatprep.subr.mxu0 0.0
    %232 = vmatpush1.msra.mxu0 %v208
    %233 = vmatprep.subr.mxu0 0.0
    %234 = vmatpush1.msra.mxu0 %v209
    %235 = vmatprep.subr.mxu0 0.0
    %236 = vmatpush1.msra.mxu0 %v210
    %237 = vmatprep.subr.mxu0 0.0
    %238 = vmatpush1.msra.mxu0 %v211
    %239 = vmatprep.subr.mxu0 0.0
    %240 = vmatpush1.msra.mxu0 %v212
    %241 = vmatprep.subr.mxu0 0.0
    %242 = vmatpush1.msra.mxu0 %v213
    %243 = vmatprep.subr.mxu0 0.0
    %244 = vmatpush1.msra.mxu0 %v214
    %245 = vmatprep.subr.mxu0 0.0
    %246 = vmatpush1.msra.mxu0 %v215
    %247 = vmatprep.subr.mxu0 0.0
    %248 = vmatpush1.msra.mxu0 %v216
    %249 = vmatprep.subr.mxu0 0.0
    %250 = vmatpush1.msra.mxu0 %v217
    %251 = vmatprep.subr.mxu0 0.0
    %252 = vmatpush1.msra.mxu0 %v218
    %253 = vmatprep.subr.mxu0 0.0
    %254 = vmatpush1.msra.mxu0 %v219
    %255 = vmatprep.subr.mxu0 0.0
    %256 = vmatpush1.msra.mxu0 %v220
    %257 = vmatprep.subr.mxu0 0.0
    %258 = vmatpush1.msra.mxu0 %v221
    %259 = vmatprep.subr.mxu0 0.0
    %260 = vmatpush1.msra.mxu0 %v222
    %261 = vmatprep.subr.mxu0 0.0
    %262 = vmatpush1.msra.mxu0 %v223
    %263 = vmatprep.subr.mxu0 0.0
    %264 = vmatpush1.msra.mxu0 0.0
    %265 = vmatprep.subr.mxu0 0.0
    %266 = vmatpush1.msra.mxu0 0.0
    %267 = vmatprep.subr.mxu0 0.0
    %268 = vmatpush1.msra.mxu0 0.0
    %269 = vmatprep.subr.mxu0 0.0
    %270 = vmatpush1.msra.mxu0 0.0
    %271 = vmatprep.subr.mxu0 0.0
    %272 = vmatpush1.msra.mxu0 0.0
    %273 = vmatprep.subr.mxu0 0.0
    %274 = vmatpush1.msra.mxu0 0.0
    %275 = vmatprep.subr.mxu0 0.0
    %276 = vmatpush1.msra.mxu0 0.0
    %277 = vmatprep.subr.mxu0 0.0
    %278 = vmatpush1.msra.mxu0 0.0
    %279 = vmatprep.subr.mxu0 0.0
    %280 = vmatpush1.msra.mxu0 0.0
    %281 = vmatprep.subr.mxu0 0.0
    %282 = vmatpush1.msra.mxu0 0.0
    %283 = vmatprep.subr.mxu0 0.0
    %284 = vmatpush1.msra.mxu0 0.0
    %285 = vmatprep.subr.mxu0 0.0
    %286 = vmatpush1.msra.mxu0 0.0
    %287 = vmatprep.subr.mxu0 0.0
    %288 = vmatpush1.msra.mxu0 0.0
    %289 = vmatprep.subr.mxu0 0.0
    %290 = vmatpush1.msra.mxu0 0.0
    %291 = vmatprep.subr.mxu0 0.0
    %292 = vmatpush1.msra.mxu0 0.0
    %293 = vmatprep.subr.mxu0 0.0
    %294 = vmatpush1.msra.mxu0 0.0
    %295 = vmatprep.mubr.f32.mxu0 0.0
    %296 = vmatmul.mubr.f32.gmra.mrb[0].mxu0 %v207
    %v297 = vpop.f32.mrb[0].mxu0
    %v298 = vadd.f32 %v229, %v297
    %v299 = vpop.f32.mrb[0].mxu0
    %300 = vdwg.mxu0
    %v301 = vmax.f32 %v298, 0.0
    %302 = vst [vmem:[#allocation2] sm:$0xff] %v301
    // Predicated region
    $region30: #{mlp_forward.1} parent=1 // pred_check
      _
    $region31: #{mlp_forward.1} parent=1 // pred_check_branch
      %304 = sbr.rel (0) target = $region33
    $region32: #{mlp_forward.1} parent=1 // pred_region
      %s306 = ssub.s32 128, 128
      %307 = vsyncadd [#allocation3], %s306
      %s309 = sshll.u32 [#allocation2], 4
      %s310 = int_to_ptr.vmem [resolvable:$true] %s309
      %312 = dma.vmem_to_hbm [thread:$0]  %s310, 128, %s7, [#allocation3]
    $region33: #{mlp_forward.1} parent=1 // pred_fallthru
      _
    // Predicated region
    $region34: #{mlp_forward.1} parent=1 // pred_check
      _
    $region35: #{mlp_forward.1} parent=1 // pred_check_branch
      %314 = sbr.rel (0) target = $region37
    $region36: #{mlp_forward.1} parent=1 // pred_region
      %315 = dma.done [#allocation3], 128
    $region37: #{mlp_forward.1} parent=1 // pred_fallthru
      _
    %316 = vsyncpa [#allocation3], 1

</llo_original>
